<compile_context>
chip_gen: v6e
topology: v6e:2x2x1
jax: 0.10.0
libtpu: 0.0.40
codegen_flags: <defaults>
</compile_context>

<pallas_src>
import functools

import jax
import jax.numpy as jnp
from jax.experimental import pallas as pl
from jax.experimental.pallas import tpu as pltpu


def _round_up(x, m):
    return (x + m - 1) // m * m


def _cdiv(a, b):
    return (a + b - 1) // b


# dtype itemsize -> sublane packing (min row-tile granularity)
_SUBLANE_PACK = {4: 8, 2: 16, 1: 32}


def _td_linear_kernel_single(x_ref, w_ref, b_ref, o_ref, *, precision):
    # Single K step: no accumulator scratch, direct fused store.
    # x_ref: (TM, Fp)  w_ref: (Fp, TN)  b_ref: (1, TN)  o_ref: (TM, TN)
    acc = jnp.dot(x_ref[...], w_ref[...],
                  preferred_element_type=jnp.float32, precision=precision)
    o_ref[...] = (acc + b_ref[...]).astype(o_ref.dtype)


def _td_linear_kernel_multi(x_ref, w_ref, b_ref, o_ref, acc_ref, *, precision):
    # grid = (row tiles, N tiles, K tiles); K is the reduction axis (last).
    # x_ref: (TM, TK)  w_ref: (TK, TN)  b_ref: (1, TN)
    # o_ref: (TM, TN)  acc_ref: (TM, TN) f32, resident across K.
    k = pl.program_id(2)
    nk = pl.num_programs(2)
    part = jnp.dot(x_ref[...], w_ref[...],
                   preferred_element_type=jnp.float32, precision=precision)

    @pl.when(k == 0)
    def _():
        acc_ref[...] = part

    @pl.when(jnp.logical_and(k > 0, k < nk - 1))
    def _():
        acc_ref[...] += part

    @pl.when(k == nk - 1)
    def _():
        # Fused final step: acc holds partials 0..nk-2; add the last partial
        # and the bias directly in the output store.
        o_ref[...] = (acc_ref[...] + part + b_ref[...]).astype(o_ref.dtype)


def prepare_td_linear_params(weight, bias, x_dtype, *,
                             tm_max=512, tk_max=512, tn_max=256,
                             single_k_budget_bytes=12 << 20):
    """Transpose + pad nn.Linear params once (hoisted out of the per-call path).

    weight: (H, F) PyTorch nn.Linear layout.  bias: (H,).
    Returns (w_padded, b_padded, meta) for time_distributed_linear_prepared.
    """
    H, F_in = weight.shape
    dsize = jnp.dtype(x_dtype).itemsize

    TN = min(tn_max, _round_up(H, 128))          # lane-dense N tile
    Hp = _round_up(H, TN)

    Fp_min = _round_up(F_in, 128)
    # Keep the K extent as a single resident strip when the per-tile working
    # set for that choice is modest; otherwise tile K at tk_max.
    single_k_bytes = (2 * dsize * (tm_max * Fp_min + Fp_min * TN + TN)
                      + 2 * dsize * tm_max * TN)
    TK = Fp_min if single_k_bytes <= single_k_budget_bytes else tk_max
    Fp = _round_up(F_in, TK)

    w_t = jnp.transpose(weight)                  # (F, H)
    if (Fp - F_in) or (Hp - H):
        w_p = jnp.pad(w_t, ((0, Fp - F_in), (0, Hp - H)))
    else:
        w_p = w_t
    b2d = bias.reshape((1, H))
    b_p = jnp.pad(b2d, ((0, 0), (0, Hp - H))) if Hp != H else b2d

    meta = dict(F_in=F_in, H=H, Fp=Fp, Hp=Hp, TK=TK, TN=TN, tm_max=tm_max)
    return w_p, b_p, meta


def time_distributed_linear_prepared(input_seq, w_p, b_p, meta):
    """TimeDistributed(nn.Linear) forward with pre-padded params."""
    assert input_seq.ndim > 2            # matches the torch assert
    B, T = input_seq.shape[0], input_seq.shape[1]
    feat = 1
    for d in input_seq.shape[2:]:
        feat *= d
    F_in, H = meta["F_in"], meta["H"]
    Fp, Hp, TK, TN = meta["Fp"], meta["Hp"], meta["TK"], meta["TN"]
    assert feat == F_in

    dt = input_seq.dtype
    dsize = jnp.dtype(dt).itemsize
    sublane = _SUBLANE_PACK.get(dsize, 8)

    BT = B * T
    x2d = input_seq.reshape((BT, F_in))   # fold (B,T,...) -> (B*T, F)

    # Row tile: dtype-aware sublane rounding; keep >= 2 row tiles when
    # possible so the "parallel" axis can shard across v7x's 2 TensorCores.
    rows = _round_up(BT, sublane)
    TM = min(meta["tm_max"], rows)
    if rows >= 2 * sublane and rows // TM < 2:
        TM = _round_up(_cdiv(rows, 2), sublane)
    BTp = _round_up(BT, TM)

    if (BTp - BT) or (Fp - F_in):
        x_p = jnp.pad(x2d, ((0, BTp - BT), (0, Fp - F_in)))
    else:
        x_p = x2d

    nm, nn_, nk = BTp // TM, Hp // TN, Fp // TK

    precision = (jax.lax.Precision.HIGHEST
                 if jnp.issubdtype(dt, jnp.floating) and dsize == 4 else None)

    # Explicit VMEM budget from actual tile bytes (2x double buffering for
    # pipelined operands, plus the f32 accumulator when K is tiled).
    tile_bytes = (2 * dsize * (TM * TK + TK * TN + TN)
                  + 2 * dsize * TM * TN)
    if nk > 1:
        tile_bytes += TM * TN * 4
    vmem_limit = int(max(16 << 20, min(2 * tile_bytes + (2 << 20), 96 << 20)))

    # Advisory cost: weight re-streams once per row tile when N/K are tiled.
    w_reads = nm if (nn_ * nk) > 1 else 1
    cost = pl.CostEstimate(
        flops=2 * BTp * Fp * Hp,
        transcendentals=0,
        bytes_accessed=(nn_ * BTp * Fp + w_reads * Fp * Hp + Hp + BTp * Hp) * dsize,
    )

    if nk == 1:
        kernel = functools.partial(_td_linear_kernel_single, precision=precision)
        grid = (nm, nn_)
        in_specs = [
            pl.BlockSpec((TM, TK), lambda i, j: (i, 0)),   # x: walks rows
            pl.BlockSpec((TK, TN), lambda i, j: (0, j)),   # w: resident per N strip
            pl.BlockSpec((1, TN), lambda i, j: (0, j)),    # bias
        ]
        out_specs = pl.BlockSpec((TM, TN), lambda i, j: (i, j))
        scratch_shapes = []
        dim_sem = ("parallel", "parallel")
    else:
        kernel = functools.partial(_td_linear_kernel_multi, precision=precision)
        grid = (nm, nn_, nk)
        in_specs = [
            pl.BlockSpec((TM, TK), lambda i, j, k: (i, k)),
            pl.BlockSpec((TK, TN), lambda i, j, k: (k, j)),
            pl.BlockSpec((1, TN), lambda i, j, k: (0, j)),
        ]
        out_specs = pl.BlockSpec((TM, TN), lambda i, j, k: (i, j))
        scratch_shapes = [pltpu.VMEM((TM, TN), jnp.float32)]
        dim_sem = ("parallel", "parallel", "arbitrary")

    out_p = pl.pallas_call(
        kernel,
        out_shape=jax.ShapeDtypeStruct((BTp, Hp), dt),
        grid=grid,
        in_specs=in_specs,
        out_specs=out_specs,
        scratch_shapes=scratch_shapes,
        compiler_params=pltpu.CompilerParams(
            dimension_semantics=dim_sem,
            vmem_limit_bytes=vmem_limit,
        ),
        cost_estimate=cost,
    )(x_p, w_p, b_p)

    # drop padding, unfold (B*T, H) -> (B, T, H)   [glue]
    return out_p[:BT, :H].reshape((B, T, H))


def time_distributed_linear(input_seq, weight, bias, **kwargs):
    """Convenience wrapper: prepare params + apply in one call."""
    w_p, b_p, meta = prepare_td_linear_params(weight, bias, input_seq.dtype,
                                              **kwargs)
    return time_distributed_linear_prepared(input_seq, w_p, b_p, meta)


if __name__ == "__main__":
    key = jax.random.PRNGKey(0)
    B, T, F_in, H = 2, 8, 32, 32

    k1, k2, k3 = jax.random.split(key, 3)
    x = jax.random.normal(k1, (B, T, F_in), dtype=jnp.float32)
    # deterministic parameter init (synthetic, not a checkpoint load)
    weight = jax.random.normal(k2, (H, F_in), dtype=jnp.float32) * 0.05
    bias = jax.random.normal(k3, (H,), dtype=jnp.float32) * 0.01

    out = time_distributed_linear(x, weight, bias)
    out = jax.block_until_ready(out)

    # pure-JAX reference of TimeDistributed(Linear) semantics
    ref = (x.reshape(B * T, F_in) @ weight.T + bias).reshape(B, T, H)
    assert out.shape == (B, T, H)
    assert jnp.allclose(out, ref, atol=1e-5, rtol=1e-5)

    print("KERNEL_OK")
</pallas_src>

<mosaic_0001>
module attributes {stable_mosaic.version = 11 : i64} {
  func.func @_td_linear_kernel_single(%arg0: i32, %arg1: i32, %arg2: memref<8x128xf32, #tpu.memory_space<vmem>>, %arg3: memref<128x128xf32, #tpu.memory_space<vmem>>, %arg4: memref<1x128xf32, #tpu.memory_space<vmem>>, %arg5: memref<8x128xf32, #tpu.memory_space<vmem>>) attributes {dimension_semantics = [#tpu.dimension_semantics<parallel>, #tpu.dimension_semantics<parallel>], iteration_bounds = array<i64: 2, 1>, scalar_prefetch = 0 : i64, scratch_operands = 0 : i64, tpu.core_type = #tpu.core_type<tc>, window_params = [{transform_indices = @transform_0, window_bounds = array<i64: 8, 128>}, {transform_indices = @transform_1, window_bounds = array<i64: 128, 128>}, {transform_indices = @transform_2, window_bounds = array<i64: 1, 128>}, {transform_indices = @transform_3, window_bounds = array<i64: 8, 128>}]} {
    %c0 = arith.constant 0 : index
    %c0_0 = arith.constant 0 : index
    %0 = vector.load %arg2[%c0, %c0_0] : memref<8x128xf32, #tpu.memory_space<vmem>>, vector<8x128xf32>
    %c0_1 = arith.constant 0 : index
    %c0_2 = arith.constant 0 : index
    %1 = vector.load %arg3[%c0_1, %c0_2] : memref<128x128xf32, #tpu.memory_space<vmem>>, vector<128x128xf32>
    %cst = arith.constant dense<0.000000e+00> : vector<8x128xf32>
    %2 = tpu.matmul %0, %1, %cst {dimension_numbers = #tpu.dot_dimension_numbers<[1], [0], [0], [1], [0, 0, 1, 1], [], []>, precision = #tpu.contract_precision<fp32>} : vector<8x128xf32>, vector<128x128xf32>, vector<8x128xf32> -> vector<8x128xf32>
    %c0_3 = arith.constant 0 : index
    %c0_4 = arith.constant 0 : index
    %3 = vector.load %arg4[%c0_3, %c0_4] : memref<1x128xf32, #tpu.memory_space<vmem>>, vector<1x128xf32>
    %4 = vector.broadcast %3 : vector<1x128xf32> to vector<8x128xf32>
    %5 = arith.addf %2, %4 : vector<8x128xf32>
    %c0_5 = arith.constant 0 : index
    %c0_6 = arith.constant 0 : index
    %6 = vector.load %arg5[%c0_5, %c0_6] : memref<8x128xf32, #tpu.memory_space<vmem>>, vector<8x128xf32>
    tpu.vector_store %arg5[%c0_5, %c0_6], %5 {strides = array<i32>} : memref<8x128xf32, #tpu.memory_space<vmem>>, vector<8x128xf32>,
    return
  }
  func.func @transform_0(%arg0: i32, %arg1: i32) -> (i32, i32) {
    %c0_i32 = arith.constant 0 : i32
    %c0_i32_0 = arith.constant 0 : i32
    return %arg0, %c0_i32 : i32, i32
  }
  func.func @transform_1(%arg0: i32, %arg1: i32) -> (i32, i32) {
    %c0_i32 = arith.constant 0 : i32
    %c0_i32_0 = arith.constant 0 : i32
    return %c0_i32, %arg1 : i32, i32
  }
  func.func @transform_2(%arg0: i32, %arg1: i32) -> (i32, i32) {
    %c0_i32 = arith.constant 0 : i32
    %c0_i32_0 = arith.constant 0 : i32
    return %c0_i32, %arg1 : i32, i32
  }
  func.func @transform_3(%arg0: i32, %arg1: i32) -> (i32, i32) {
    %c0_i32 = arith.constant 0 : i32
    return %arg0, %arg1 : i32, i32
  }
}

</mosaic_0001>

<llo_original>
// kernel: tpu_custom_call.1
$region0: #{tpu_custom_call.1}
  #allocation0 [shape = 'u32[]', space=smem, size = 0x4, offset = 0x4, fixed_abs, tag = 'smem constant byte address 0x4 - core index']
  #allocation1 [shape = 'u32[144,128]{1,0:T(1,128)}', space=vmem, size = 0x12000, scoped, tag = 'internal scratch']
  %s0 = inlined_call_operand.hbm [shape: f32[16,128], index: 0, kind: input, shape index: {}]
  %s1 = inlined_call_operand.hbm [shape: f32[128,128], index: 1, kind: input, shape index: {}]
  %s2 = inlined_call_operand.vmem [shape: f32[1,128], index: 2, kind: input, shape index: {}]
  %s3 = inlined_call_operand.hbm [shape: f32[16,128], index: 3, kind: output, shape index: {}]
  %s4 = sld [smem:[#allocation0]]
  $region53: #{tpu_custom_call.1} parent=0
    _
  %s6 = ssub.s32 1, %s4
  %s7 = scalar_select 0, %s6, %s4
  $region1: #{tpu_custom_call.1} parent=0
    #allocation2 [shape = 'u8[8192]{0}', space=vmem, size = 0x2000, scoped, tag = 'input window, operand 0']
    #allocation3 [shape = 's32[2]{0}', space=sflag, size = 0x8, scoped, tag = 'scoped memory for tpu_custom_call.1']
    #allocation4 [shape = 's32[2]{0}', space=sflag, size = 0x8, scoped, tag = 'scoped memory for tpu_custom_call.1']
    #allocation5 [shape = 'u8[65536]{0}', space=vmem, size = 0x10000, scoped, tag = 'input window, operand 1, single buffered']
    #allocation6 [shape = 's32[1]{0}', space=sflag, size = 0x4, scoped, tag = 'scoped memory for tpu_custom_call.1']
    #allocation7 [shape = 'u8[8192]{0}', space=vmem, size = 0x2000, scoped, tag = 'output window, operand 0']
    %8 = vsyncpa [#allocation3], 0
    %s9 = scalar_lea.sflag [#allocation3], 1
    %10 = vsyncpa %s9, 0
    %11 = vsyncpa [#allocation6], 0
    %12 = vsyncpa [#allocation4], 0
    %s13 = scalar_lea.sflag [#allocation4], 1
    %14 = vsyncpa %s13, 0
    loop: start=0, step=1, limit=4
    $region2: #{tpu_custom_call.1} parent=1 // loop_pre_header
      _
    $region3: #{tpu_custom_call.1} parent=1 // loop_header
      %s16 = sphi 0, %s20
      %p17 = scmp.ge.s32.totalorder %s16, 4
      %s23 = sphi 0, %s35
      %s24 = sphi 0, %s31
      %s25 = sphi 0, %s23
      %s26 = sphi 0, %s24
      %s27 = sphi 0, %s25
      %s28 = sphi 0, %s26
      %s38 = sphi 0, %s40
      %s41 = sphi 0, %s38
      %s42 = sphi 0, %s41
      %s58 = sphi 0, %s42
      %s64 = sphi 0, %s66
      %s67 = sphi 0, %s64
      %s68 = sphi 0, %s67
      %s84 = sphi 0, %s68
      %s90 = sphi 0, %s92
      %s93 = sphi 0, %s90
      %s94 = sphi 0, %s93
      %s110 = sphi 0, %s94
      %s118 = sphi 0, %s120
      %s121 = sphi 0, %s118
      %s122 = sphi 0, %s121
      %s138 = sphi 0, %s122
    $region4: #{tpu_custom_call.1} parent=1 // loop_header_branch
      %19 = sbr.rel (%p17) target = $region8
    $region5: #{tpu_custom_call.1} parent=1 // loop_body
      %s21 = ssub.s32 %s16, 1
      %s22 = ssub.s32 %s16, 2
      %s29 = sadd.s32 1, %s24
      %p30 = scmp.ge.s32.totalorder %s29, 1
      %s31 = scalar_select %p30, 0, %s29
      %s32 = sadd.s32 1, %s23
      %s33 = scalar_select %p30, %s32, %s23
      %p34 = scmp.ge.s32.totalorder %s33, 2
      %s35 = scalar_select %p34, 0, %s33
      %s36 = ssub.s32 %s23, %s35
      %p37 = scmp.eq.s32.totalorder %s36, 0
      %s39 = sadd.s32 %s38, 1
      %s40 = scalar_select %p37, %s38, %s39
      %p43 = pneg %p37
      %p44 = scmp.eq.s32.totalorder %s16, 1
      %p45 = por %p43, %p44
      %p46 = scmp.ne.s32.totalorder %s38, %s41
      %p47 = scmp.eq.s32.totalorder %s16, 0
      %p48 = por %p46, %p47
      %p49 = scmp.ne.s32.totalorder %s38, %s41
      %p50 = scmp.eq.s32.totalorder %s21, 1
      %p51 = por %p49, %p50
      %p52 = scmp.ne.s32.totalorder %s41, %s42
      %p53 = scmp.eq.s32.totalorder %s21, 0
      %p54 = por %p52, %p53
      %p55 = scmp.ne.s32.totalorder %s41, %s42
      %p56 = scmp.eq.s32.totalorder %s22, 1
      %p57 = por %p55, %p56
      %p59 = scmp.ne.s32.totalorder %s42, %s58
      %p60 = scmp.eq.s32.totalorder %s22, 0
      %p61 = por %p59, %p60
      %s62 = ssub.s32 %s24, %s31
      %p63 = scmp.eq.s32.totalorder %s62, 0
      %s65 = sadd.s32 %s64, 1
      %s66 = scalar_select %p63, %s64, %s65
      %p69 = pneg %p63
      %p70 = scmp.eq.s32.totalorder %s16, 1
      %p71 = por %p69, %p70
      %p72 = scmp.ne.s32.totalorder %s64, %s67
      %p73 = scmp.eq.s32.totalorder %s16, 0
      %p74 = por %p72, %p73
      %p75 = scmp.ne.s32.totalorder %s64, %s67
      %p76 = scmp.eq.s32.totalorder %s21, 1
      %p77 = por %p75, %p76
      %p78 = scmp.ne.s32.totalorder %s67, %s68
      %p79 = scmp.eq.s32.totalorder %s21, 0
      %p80 = por %p78, %p79
      %p81 = scmp.ne.s32.totalorder %s67, %s68
      %p82 = scmp.eq.s32.totalorder %s22, 1
      %p83 = por %p81, %p82
      %p85 = scmp.ne.s32.totalorder %s68, %s84
      %p86 = scmp.eq.s32.totalorder %s22, 0
      %p87 = por %p85, %p86
      %s88 = ssub.s32 %s24, %s31
      %p89 = scmp.eq.s32.totalorder %s88, 0
      %s91 = sadd.s32 %s90, 1
      %s92 = scalar_select %p89, %s90, %s91
      %p95 = pneg %p89
      %p96 = scmp.eq.s32.totalorder %s16, 1
      %p97 = por %p95, %p96
      %p98 = scmp.ne.s32.totalorder %s90, %s93
      %p99 = scmp.eq.s32.totalorder %s16, 0
      %p100 = por %p98, %p99
      %p101 = scmp.ne.s32.totalorder %s90, %s93
      %p102 = scmp.eq.s32.totalorder %s21, 1
      %p103 = por %p101, %p102
      %p104 = scmp.ne.s32.totalorder %s93, %s94
      %p105 = scmp.eq.s32.totalorder %s21, 0
      %p106 = por %p104, %p105
      %p107 = scmp.ne.s32.totalorder %s93, %s94
      %p108 = scmp.eq.s32.totalorder %s22, 1
      %p109 = por %p107, %p108
      %p111 = scmp.ne.s32.totalorder %s94, %s110
      %p112 = scmp.eq.s32.totalorder %s22, 0
      %p113 = por %p111, %p112
      %s114 = ssub.s32 %s23, %s35
      %s115 = ssub.s32 %s24, %s31
      %s116 = sor.u32 %s114, %s115
      %p117 = scmp.eq.s32.totalorder %s116, 0
      %s119 = sadd.s32 %s118, 1
      %s120 = scalar_select %p117, %s118, %s119
      %p123 = pneg %p117
      %p124 = scmp.eq.s32.totalorder %s16, 1
      %p125 = por %p123, %p124
      %p126 = scmp.ne.s32.totalorder %s118, %s121
      %p127 = scmp.eq.s32.totalorder %s16, 0
      %p128 = por %p126, %p127
      %p129 = scmp.ne.s32.totalorder %s118, %s121
      %p130 = scmp.eq.s32.totalorder %s21, 1
      %p131 = por %p129, %p130
      %p132 = scmp.ne.s32.totalorder %s121, %s122
      %p133 = scmp.eq.s32.totalorder %s21, 0
      %p134 = por %p132, %p133
      %p135 = scmp.ne.s32.totalorder %s121, %s122
      %p136 = scmp.eq.s32.totalorder %s22, 1
      %p137 = por %p135, %p136
      %p139 = scmp.ne.s32.totalorder %s122, %s138
      %p140 = scmp.eq.s32.totalorder %s22, 0
      %p141 = por %p139, %p140
      %p142 = scmp.le.s32.totalorder 1, %s16
      %p143 = scmp.lt.s32.totalorder %s16, 3
      %p144 = pnand %p142, %p143
      %p145 = pneg %p144
      // Predicated region
      $region9: #{tpu_custom_call.1} parent=5 // pred_check
        _
      $region10: #{tpu_custom_call.1} parent=5 // pred_check_branch
        %147 = sbr.rel (%p144) target = $region12
      $region11: #{tpu_custom_call.1} parent=5 // pred_region
        %s148 = ssub.s32 %s16, 1
        // Predicated region
        $region13: #{tpu_custom_call.1} parent=11 // pred_check
          %p149 = pneg %p80
        $region14: #{tpu_custom_call.1} parent=11 // pred_check_branch
          %151 = sbr.rel (%p149) target = $region16
        $region15: #{tpu_custom_call.1} parent=11 // pred_region
          %s153 = ssub.s32 2048, 2048
          %154 = vsyncadd [#allocation6], %s153
          %s155 = smul.addr %s26, 128
          %s156 = scalar_lea.hbm %s1, %s155
          %s157 = sshll.u32 [#allocation5], 4
          %s158 = int_to_ptr.vmem [resolvable:$true] %s157
          %163 = dma.hbm_to_vmem [thread:$0]  %s156, 2048, %s158, [#allocation6], 128, 128, 8
        $region16: #{tpu_custom_call.1} parent=11 // pred_fallthru
          _
        // Predicated region
        $region17: #{tpu_custom_call.1} parent=11 // pred_check
          %p164 = pneg %p106
        $region18: #{tpu_custom_call.1} parent=11 // pred_check_branch
          %166 = sbr.rel (%p164) target = $region20
        $region19: #{tpu_custom_call.1} parent=11 // pred_region
          %p167 = scmp.lt.s32.totalorder %s26, 0
          %s168 = scalar_select %p167, %s26, 0
          %s169 = scalar_lea.vmem %s2, %s168
        $region20: #{tpu_custom_call.1} parent=11 // pred_fallthru
          _
      $region12: #{tpu_custom_call.1} parent=5 // pred_fallthru
        _
      %p170 = scmp.lt.s32.totalorder %s16, 2
      // Predicated region
      $region21: #{tpu_custom_call.1} parent=5 // pred_check
        %p171 = pneg %p170
      $region22: #{tpu_custom_call.1} parent=5 // pred_check_branch
        %173 = sbr.rel (%p171) target = $region24
      $region23: #{tpu_custom_call.1} parent=5 // pred_region
        // Predicated region
        $region25: #{tpu_custom_call.1} parent=23 // pred_check
          %p174 = pneg %p48
        $region26: #{tpu_custom_call.1} parent=23 // pred_check_branch
          %176 = sbr.rel (%p174) target = $region28
        $region27: #{tpu_custom_call.1} parent=23 // pred_region
          %s177 = sand.u32 %s38, 1
          %s178 = scalar_lea.sflag [#allocation3], %s177
          %s179 = sand.u32 %s38, 1
          %s180 = smul.addr %s179, 8
          %s181 = scalar_lea.vmem [#allocation2], %s180
          %s183 = ssub.s32 128, 128
          %184 = vsyncadd %s178, %s183
          %s185 = smul.addr %s23, 128
          %s186 = scalar_lea.hbm %s0, %s185
          %s188 = sshll.u32 %s181, 4
          %s189 = int_to_ptr.vmem [resolvable:$true] %s188
          %191 = dma.hbm_to_vmem [thread:$0]  %s186, 128, %s189, %s178
        $region28: #{tpu_custom_call.1} parent=23 // pred_fallthru
          _
      $region24: #{tpu_custom_call.1} parent=5 // pred_fallthru
        _
      %p192 = scmp.le.s32.totalorder 1, %s16
      %p193 = scmp.lt.s32.totalorder %s16, 3
      %p194 = pnand %p192, %p193
      %p195 = pneg %p194
      // Predicated region
      $region29: #{tpu_custom_call.1} parent=5 // pred_check
        _
      $region30: #{tpu_custom_call.1} parent=5 // pred_check_branch
        %197 = sbr.rel (%p194) target = $region32
      $region31: #{tpu_custom_call.1} parent=5 // pred_region
        %s198 = ssub.s32 %s16, 1
        %s199 = sand.u32 %s41, 1
        %s200 = scalar_lea.sflag [#allocation3], %s199
        %s201 = sand.u32 %s41, 1
        %s202 = smul.addr %s201, 8
        %s203 = scalar_lea.vmem [#allocation2], %s202
        // Predicated region
        $region33: #{tpu_custom_call.1} parent=31 // pred_check
          %p204 = pneg %p54
        $region34: #{tpu_custom_call.1} parent=31 // pred_check_branch
          %206 = sbr.rel (%p204) target = $region36
        $region35: #{tpu_custom_call.1} parent=31 // pred_region
          %207 = dma.done %s200, 128
        $region36: #{tpu_custom_call.1} parent=31 // pred_fallthru
          _
        // Predicated region
        $region37: #{tpu_custom_call.1} parent=31 // pred_check
          %p208 = pneg %p80
        $region38: #{tpu_custom_call.1} parent=31 // pred_check_branch
          %210 = sbr.rel (%p208) target = $region40
        $region39: #{tpu_custom_call.1} parent=31 // pred_region
          %211 = dma.done [#allocation6], 2048
        $region40: #{tpu_custom_call.1} parent=31 // pred_fallthru
          _
        %s212 = sand.u32 %s41, 1
        %s213 = scalar_lea.sflag [#allocation3], %s212
        %s214 = sand.u32 %s41, 1
        %s215 = smul.addr %s214, 8
        %s216 = scalar_lea.vmem [#allocation2], %s215
        %p217 = pneg %p54
        %p218 = pneg %p51
        %p219 = pneg %p80
        %p220 = pneg %p77
        %p221 = scmp.lt.s32.totalorder %s26, 0
        %s222 = scalar_select %p221, %s26, 0
        %s223 = scalar_lea.vmem %s2, %s222
        %p224 = pneg %p106
        %p225 = pneg %p103
        %p226 = pneg %p134
        %p227 = pneg %p131
        %s228 = sand.u32 %s121, 1
        %s229 = scalar_lea.sflag [#allocation4], %s228
        %s230 = sand.u32 %s121, 1
        %s231 = smul.addr %s230, 8
        %s232 = scalar_lea.vmem [#allocation7], %s231
        %p233 = scmp.lt.s32.totalorder %s26, 0
        %s234 = scalar_select %p233, %s26, 0
        %s235 = scalar_lea.vmem %s2, %s234
        %v236 = vld [vmem:[%s203] sm:$0xff]
        %v237 = vld [vmem:[#allocation5] sm:$0xff]
        %v238 = vld [vmem:[#allocation5 + $0x8] sm:$0xff]
        %v239 = vld [vmem:[#allocation5 + $0x10] sm:$0xff]
        %v240 = vld [vmem:[#allocation5 + $0x18] sm:$0xff]
        %v241 = vld [vmem:[#allocation5 + $0x20] sm:$0xff]
        %v242 = vld [vmem:[#allocation5 + $0x28] sm:$0xff]
        %v243 = vld [vmem:[#allocation5 + $0x30] sm:$0xff]
        %v244 = vld [vmem:[#allocation5 + $0x38] sm:$0xff]
        %v245 = vld [vmem:[#allocation5 + $0x40] sm:$0xff]
        %v246 = vld [vmem:[#allocation5 + $0x48] sm:$0xff]
        %v247 = vld [vmem:[#allocation5 + $0x50] sm:$0xff]
        %v248 = vld [vmem:[#allocation5 + $0x58] sm:$0xff]
        %v249 = vld [vmem:[#allocation5 + $0x60] sm:$0xff]
        %v250 = vld [vmem:[#allocation5 + $0x68] sm:$0xff]
        %v251 = vld [vmem:[#allocation5 + $0x70] sm:$0xff]
        %v252 = vld [vmem:[#allocation5 + $0x78] sm:$0xff]
        %v253 = vld [vmem:[%s235] sm:$0x1]
        %v255 = vlaneseq
        %v256 = vshrl.u32 %v255, 7
        %v257 = vsub.s32 0, %v256
        %v258 = vrot.slane %v253, %v257
        %260 = vmatprep.subr.mxu0 0.0
        %v261 = vand.u32 %v252, 4294901760
        %262 = vmatpush1.msra.mxu0 %v261
        %263 = vmatprep.subr.mxu0 0.0
        %v264 = vand.u32 %v251, 4294901760
        %265 = vmatpush1.msra.mxu0 %v264
        %266 = vmatprep.subr.mxu0 0.0
        %v267 = vand.u32 %v250, 4294901760
        %268 = vmatpush1.msra.mxu0 %v267
        %269 = vmatprep.subr.mxu0 0.0
        %v270 = vand.u32 %v249, 4294901760
        %271 = vmatpush1.msra.mxu0 %v270
        %272 = vmatprep.subr.mxu0 0.0
        %v273 = vand.u32 %v248, 4294901760
        %274 = vmatpush1.msra.mxu0 %v273
        %275 = vmatprep.subr.mxu0 0.0
        %v276 = vand.u32 %v247, 4294901760
        %277 = vmatpush1.msra.mxu0 %v276
        %278 = vmatprep.subr.mxu0 0.0
        %v279 = vand.u32 %v246, 4294901760
        %280 = vmatpush1.msra.mxu0 %v279
        %281 = vmatprep.subr.mxu0 0.0
        %v282 = vand.u32 %v245, 4294901760
        %283 = vmatpush1.msra.mxu0 %v282
        %284 = vmatprep.subr.mxu0 0.0
        %v285 = vand.u32 %v244, 4294901760
        %286 = vmatpush1.msra.mxu0 %v285
        %287 = vmatprep.subr.mxu0 0.0
        %v288 = vand.u32 %v243, 4294901760
        %289 = vmatpush1.msra.mxu0 %v288
        %290 = vmatprep.subr.mxu0 0.0
        %v291 = vand.u32 %v242, 4294901760
        %292 = vmatpush1.msra.mxu0 %v291
        %293 = vmatprep.subr.mxu0 0.0
        %v294 = vand.u32 %v241, 4294901760
        %295 = vmatpush1.msra.mxu0 %v294
        %296 = vmatprep.subr.mxu0 0.0
        %v297 = vand.u32 %v240, 4294901760
        %298 = vmatpush1.msra.mxu0 %v297
        %299 = vmatprep.subr.mxu0 0.0
        %v300 = vand.u32 %v239, 4294901760
        %301 = vmatpush1.msra.mxu0 %v300
        %302 = vmatprep.subr.mxu0 0.0
        %v303 = vand.u32 %v238, 4294901760
        %304 = vmatpush1.msra.mxu0 %v303
        %305 = vmatprep.subr.mxu0 0.0
        %v306 = vand.u32 %v237, 4294901760
        %307 = vmatpush1.msra.mxu0 %v306
        %308 = vmatprep.subr.mxu0 0.0
        %309 = vmatpush2.msra.mxu0 0.0
        %310 = vmatprep.subr.mxu0 0.0
        %311 = vmatpush2.msra.mxu0 0.0
        %312 = vmatprep.subr.mxu0 0.0
        %313 = vmatpush2.msra.mxu0 0.0
        %314 = vmatprep.subr.mxu0 0.0
        %315 = vmatpush2.msra.mxu0 0.0
        %316 = vmatprep.subr.mxu0 0.0
        %317 = vmatpush2.msra.mxu0 0.0
        %318 = vmatprep.subr.mxu0 0.0
        %319 = vmatpush2.msra.mxu0 0.0
        %320 = vmatprep.subr.mxu0 0.0
        %321 = vmatpush2.msra.mxu0 0.0
        %322 = vmatprep.subr.mxu0 0.0
        %323 = vmatpush2.msra.mxu0 0.0
        %324 = vmatprep.subr.mxu0 0.0
        %325 = vmatpush2.msra.mxu0 0.0
        %326 = vmatprep.subr.mxu0 0.0
        %327 = vmatpush2.msra.mxu0 0.0
        %328 = vmatprep.subr.mxu0 0.0
        %329 = vmatpush2.msra.mxu0 0.0
        %330 = vmatprep.subr.mxu0 0.0
        %331 = vmatpush2.msra.mxu0 0.0
        %332 = vmatprep.subr.mxu0 0.0
        %333 = vmatpush2.msra.mxu0 0.0
        %334 = vmatprep.subr.mxu0 0.0
        %335 = vmatpush2.msra.mxu0 0.0
        %336 = vmatprep.subr.mxu0 0.0
        %337 = vmatpush2.msra.mxu0 0.0
        %338 = vmatprep.subr.mxu0 0.0
        %339 = vmatpush2.msra.mxu0 0.0
        %340 = vmatprep.mubr.f32.mxu0 0.0
        %v341 = vand.u32 %v236, 4294901760
        %v342 = vsub.f32 %v236, %v341
        %v343 = vand.u32 %v342, 4294901760
        %v344 = vsub.f32 %v342, %v343
        %v345 = vand.u32 %v344, 4294901760
        %346 = vmatmul.mubr.f32.gmra.mxu0 %v345
        %v347 = vpop.f32.mrf.mxu0
        %v348 = vadd.f32 %v258, %v347
        %v349 = vpop.f32.mrf.mxu0
        %350 = vdwg.mxu0
        %351 = vmatprep.subr.mxu0 0.0
        %v352 = vand.u32 %v252, 4294901760
        %v353 = vsub.f32 %v252, %v352
        %v354 = vand.u32 %v353, 4294901760
        %v355 = vsub.f32 %v353, %v354
        %v356 = vand.u32 %v355, 4294901760
        %357 = vmatpush1.msra.mxu0 %v356
        %358 = vmatprep.subr.mxu0 0.0
        %v359 = vand.u32 %v251, 4294901760
        %v360 = vsub.f32 %v251, %v359
        %v361 = vand.u32 %v360, 4294901760
        %v362 = vsub.f32 %v360, %v361
        %v363 = vand.u32 %v362, 4294901760
        %364 = vmatpush1.msra.mxu0 %v363
        %365 = vmatprep.subr.mxu0 0.0
        %v366 = vand.u32 %v250, 4294901760
        %v367 = vsub.f32 %v250, %v366
        %v368 = vand.u32 %v367, 4294901760
        %v369 = vsub.f32 %v367, %v368
        %v370 = vand.u32 %v369, 4294901760
        %371 = vmatpush1.msra.mxu0 %v370
        %372 = vmatprep.subr.mxu0 0.0
        %v373 = vand.u32 %v249, 4294901760
        %v374 = vsub.f32 %v249, %v373
        %v375 = vand.u32 %v374, 4294901760
        %v376 = vsub.f32 %v374, %v375
        %v377 = vand.u32 %v376, 4294901760
        %378 = vmatpush1.msra.mxu0 %v377
        %379 = vmatprep.subr.mxu0 0.0
        %v380 = vand.u32 %v248, 4294901760
        %v381 = vsub.f32 %v248, %v380
        %v382 = vand.u32 %v381, 4294901760
        %v383 = vsub.f32 %v381, %v382
        %v384 = vand.u32 %v383, 4294901760
        %385 = vmatpush1.msra.mxu0 %v384
        %386 = vmatprep.subr.mxu0 0.0
        %v387 = vand.u32 %v247, 4294901760
        %v388 = vsub.f32 %v247, %v387
        %v389 = vand.u32 %v388, 4294901760
        %v390 = vsub.f32 %v388, %v389
        %v391 = vand.u32 %v390, 4294901760
        %392 = vmatpush1.msra.mxu0 %v391
        %393 = vmatprep.subr.mxu0 0.0
        %v394 = vand.u32 %v246, 4294901760
        %v395 = vsub.f32 %v246, %v394
        %v396 = vand.u32 %v395, 4294901760
        %v397 = vsub.f32 %v395, %v396
        %v398 = vand.u32 %v397, 4294901760
        %399 = vmatpush1.msra.mxu0 %v398
        %400 = vmatprep.subr.mxu0 0.0
        %v401 = vand.u32 %v245, 4294901760
        %v402 = vsub.f32 %v245, %v401
        %v403 = vand.u32 %v402, 4294901760
        %v404 = vsub.f32 %v402, %v403
        %v405 = vand.u32 %v404, 4294901760
        %406 = vmatpush1.msra.mxu0 %v405
        %407 = vmatprep.subr.mxu0 0.0
        %v408 = vand.u32 %v244, 4294901760
        %v409 = vsub.f32 %v244, %v408
        %v410 = vand.u32 %v409, 4294901760
        %v411 = vsub.f32 %v409, %v410
        %v412 = vand.u32 %v411, 4294901760
        %413 = vmatpush1.msra.mxu0 %v412
        %414 = vmatprep.subr.mxu0 0.0
        %v415 = vand.u32 %v243, 4294901760
        %v416 = vsub.f32 %v243, %v415
        %v417 = vand.u32 %v416, 4294901760
        %v418 = vsub.f32 %v416, %v417
        %v419 = vand.u32 %v418, 4294901760
        %420 = vmatpush1.msra.mxu0 %v419
        %421 = vmatprep.subr.mxu0 0.0
        %v422 = vand.u32 %v242, 4294901760
        %v423 = vsub.f32 %v242, %v422
        %v424 = vand.u32 %v423, 4294901760
        %v425 = vsub.f32 %v423, %v424
        %v426 = vand.u32 %v425, 4294901760
        %427 = vmatpush1.msra.mxu0 %v426
        %428 = vmatprep.subr.mxu0 0.0
        %v429 = vand.u32 %v241, 4294901760
        %v430 = vsub.f32 %v241, %v429
        %v431 = vand.u32 %v430, 4294901760
        %v432 = vsub.f32 %v430, %v431
        %v433 = vand.u32 %v432, 4294901760
        %434 = vmatpush1.msra.mxu0 %v433
        %435 = vmatprep.subr.mxu0 0.0
        %v436 = vand.u32 %v240, 4294901760
        %v437 = vsub.f32 %v240, %v436
        %v438 = vand.u32 %v437, 4294901760
        %v439 = vsub.f32 %v437, %v438
        %v440 = vand.u32 %v439, 4294901760
        %441 = vmatpush1.msra.mxu0 %v440
        %442 = vmatprep.subr.mxu0 0.0
        %v443 = vand.u32 %v239, 4294901760
        %v444 = vsub.f32 %v239, %v443
        %v445 = vand.u32 %v444, 4294901760
        %v446 = vsub.f32 %v444, %v445
        %v447 = vand.u32 %v446, 4294901760
        %448 = vmatpush1.msra.mxu0 %v447
        %449 = vmatprep.subr.mxu0 0.0
        %v450 = vand.u32 %v238, 4294901760
        %v451 = vsub.f32 %v238, %v450
        %v452 = vand.u32 %v451, 4294901760
        %v453 = vsub.f32 %v451, %v452
        %v454 = vand.u32 %v453, 4294901760
        %455 = vmatpush1.msra.mxu0 %v454
        %456 = vmatprep.subr.mxu0 0.0
        %v457 = vand.u32 %v237, 4294901760
        %v458 = vsub.f32 %v237, %v457
        %v459 = vand.u32 %v458, 4294901760
        %v460 = vsub.f32 %v458, %v459
        %v461 = vand.u32 %v460, 4294901760
        %462 = vmatpush1.msra.mxu0 %v461
        %463 = vmatprep.subr.mxu0 0.0
        %464 = vmatpush2.msra.mxu0 0.0
        %465 = vmatprep.subr.mxu0 0.0
        %466 = vmatpush2.msra.mxu0 0.0
        %467 = vmatprep.subr.mxu0 0.0
        %468 = vmatpush2.msra.mxu0 0.0
        %469 = vmatprep.subr.mxu0 0.0
        %470 = vmatpush2.msra.mxu0 0.0
        %471 = vmatprep.subr.mxu0 0.0
        %472 = vmatpush2.msra.mxu0 0.0
        %473 = vmatprep.subr.mxu0 0.0
        %474 = vmatpush2.msra.mxu0 0.0
        %475 = vmatprep.subr.mxu0 0.0
        %476 = vmatpush2.msra.mxu0 0.0
        %477 = vmatprep.subr.mxu0 0.0
        %478 = vmatpush2.msra.mxu0 0.0
        %479 = vmatprep.subr.mxu0 0.0
        %480 = vmatpush2.msra.mxu0 0.0
        %481 = vmatprep.subr.mxu0 0.0
        %482 = vmatpush2.msra.mxu0 0.0
        %483 = vmatprep.subr.mxu0 0.0
        %484 = vmatpush2.msra.mxu0 0.0
        %485 = vmatprep.subr.mxu0 0.0
        %486 = vmatpush2.msra.mxu0 0.0
        %487 = vmatprep.subr.mxu0 0.0
        %488 = vmatpush2.msra.mxu0 0.0
        %489 = vmatprep.subr.mxu0 0.0
        %490 = vmatpush2.msra.mxu0 0.0
        %491 = vmatprep.subr.mxu0 0.0
        %492 = vmatpush2.msra.mxu0 0.0
        %493 = vmatprep.subr.mxu0 0.0
        %494 = vmatpush2.msra.mxu0 0.0
        %495 = vmatprep.mubr.f32.mxu0 0.0
        %v496 = vand.u32 %v236, 4294901760
        %497 = vmatmul.mubr.f32.gmra.mxu0 %v496
        %v498 = vpop.f32.mrf.mxu0
        %v499 = vadd.f32 %v348, %v498
        %v500 = vpop.f32.mrf.mxu0
        %501 = vdwg.mxu0
        %502 = vmatprep.subr.mxu0 0.0
        %v503 = vand.u32 %v252, 4294901760
        %v504 = vsub.f32 %v252, %v503
        %505 = vmatpush1.msra.mxu0 %v504
        %506 = vmatprep.subr.mxu0 0.0
        %v507 = vand.u32 %v251, 4294901760
        %v508 = vsub.f32 %v251, %v507
        %509 = vmatpush1.msra.mxu0 %v508
        %510 = vmatprep.subr.mxu0 0.0
        %v511 = vand.u32 %v250, 4294901760
        %v512 = vsub.f32 %v250, %v511
        %513 = vmatpush1.msra.mxu0 %v512
        %514 = vmatprep.subr.mxu0 0.0
        %v515 = vand.u32 %v249, 4294901760
        %v516 = vsub.f32 %v249, %v515
        %517 = vmatpush1.msra.mxu0 %v516
        %518 = vmatprep.subr.mxu0 0.0
        %v519 = vand.u32 %v248, 4294901760
        %v520 = vsub.f32 %v248, %v519
        %521 = vmatpush1.msra.mxu0 %v520
        %522 = vmatprep.subr.mxu0 0.0
        %v523 = vand.u32 %v247, 4294901760
        %v524 = vsub.f32 %v247, %v523
        %525 = vmatpush1.msra.mxu0 %v524
        %526 = vmatprep.subr.mxu0 0.0
        %v527 = vand.u32 %v246, 4294901760
        %v528 = vsub.f32 %v246, %v527
        %529 = vmatpush1.msra.mxu0 %v528
        %530 = vmatprep.subr.mxu0 0.0
        %v531 = vand.u32 %v245, 4294901760
        %v532 = vsub.f32 %v245, %v531
        %533 = vmatpush1.msra.mxu0 %v532
        %534 = vmatprep.subr.mxu0 0.0
        %v535 = vand.u32 %v244, 4294901760
        %v536 = vsub.f32 %v244, %v535
        %537 = vmatpush1.msra.mxu0 %v536
        %538 = vmatprep.subr.mxu0 0.0
        %v539 = vand.u32 %v243, 4294901760
        %v540 = vsub.f32 %v243, %v539
        %541 = vmatpush1.msra.mxu0 %v540
        %542 = vmatprep.subr.mxu0 0.0
        %v543 = vand.u32 %v242, 4294901760
        %v544 = vsub.f32 %v242, %v543
        %545 = vmatpush1.msra.mxu0 %v544
        %546 = vmatprep.subr.mxu0 0.0
        %v547 = vand.u32 %v241, 4294901760
        %v548 = vsub.f32 %v241, %v547
        %549 = vmatpush1.msra.mxu0 %v548
        %550 = vmatprep.subr.mxu0 0.0
        %v551 = vand.u32 %v240, 4294901760
        %v552 = vsub.f32 %v240, %v551
        %553 = vmatpush1.msra.mxu0 %v552
        %554 = vmatprep.subr.mxu0 0.0
        %v555 = vand.u32 %v239, 4294901760
        %v556 = vsub.f32 %v239, %v555
        %557 = vmatpush1.msra.mxu0 %v556
        %558 = vmatprep.subr.mxu0 0.0
        %v559 = vand.u32 %v238, 4294901760
        %v560 = vsub.f32 %v238, %v559
        %561 = vmatpush1.msra.mxu0 %v560
        %562 = vmatprep.subr.mxu0 0.0
        %v563 = vand.u32 %v237, 4294901760
        %v564 = vsub.f32 %v237, %v563
        %565 = vmatpush1.msra.mxu0 %v564
        %566 = vmatprep.subr.mxu0 0.0
        %567 = vmatpush2.msra.mxu0 0.0
        %568 = vmatprep.subr.mxu0 0.0
        %569 = vmatpush2.msra.mxu0 0.0
        %570 = vmatprep.subr.mxu0 0.0
        %571 = vmatpush2.msra.mxu0 0.0
        %572 = vmatprep.subr.mxu0 0.0
        %573 = vmatpush2.msra.mxu0 0.0
        %574 = vmatprep.subr.mxu0 0.0
        %575 = vmatpush2.msra.mxu0 0.0
        %576 = vmatprep.subr.mxu0 0.0
        %577 = vmatpush2.msra.mxu0 0.0
        %578 = vmatprep.subr.mxu0 0.0
        %579 = vmatpush2.msra.mxu0 0.0
        %580 = vmatprep.subr.mxu0 0.0
        %581 = vmatpush2.msra.mxu0 0.0
        %582 = vmatprep.subr.mxu0 0.0
        %583 = vmatpush2.msra.mxu0 0.0
        %584 = vmatprep.subr.mxu0 0.0
        %585 = vmatpush2.msra.mxu0 0.0
        %586 = vmatprep.subr.mxu0 0.0
        %587 = vmatpush2.msra.mxu0 0.0
        %588 = vmatprep.subr.mxu0 0.0
        %589 = vmatpush2.msra.mxu0 0.0
        %590 = vmatprep.subr.mxu0 0.0
        %591 = vmatpush2.msra.mxu0 0.0
        %592 = vmatprep.subr.mxu0 0.0
        %593 = vmatpush2.msra.mxu0 0.0
        %594 = vmatprep.subr.mxu0 0.0
        %595 = vmatpush2.msra.mxu0 0.0
        %596 = vmatprep.subr.mxu0 0.0
        %597 = vmatpush2.msra.mxu0 0.0
        %598 = vmatprep.mubr.f32.mxu0 0.0
        %v599 = vand.u32 %v236, 4294901760
        %v600 = vsub.f32 %v236, %v599
        %601 = vmatmul.mubr.f32.gmra.mxu0 %v600
        %v602 = vpop.f32.mrf.mxu0
        %v603 = vadd.f32 %v499, %v602
        %v604 = vpop.f32.mrf.mxu0
        %605 = vdwg.mxu0
        %606 = vmatprep.subr.mxu0 0.0
        %v607 = vand.u32 %v252, 4294901760
        %608 = vmatpush1.msra.mxu0 %v607
        %609 = vmatprep.subr.mxu0 0.0
        %v610 = vand.u32 %v251, 4294901760
        %611 = vmatpush1.msra.mxu0 %v610
        %612 = vmatprep.subr.mxu0 0.0
        %v613 = vand.u32 %v250, 4294901760
        %614 = vmatpush1.msra.mxu0 %v613
        %615 = vmatprep.subr.mxu0 0.0
        %v616 = vand.u32 %v249, 4294901760
        %617 = vmatpush1.msra.mxu0 %v616
        %618 = vmatprep.subr.mxu0 0.0
        %v619 = vand.u32 %v248, 4294901760
        %620 = vmatpush1.msra.mxu0 %v619
        %621 = vmatprep.subr.mxu0 0.0
        %v622 = vand.u32 %v247, 4294901760
        %623 = vmatpush1.msra.mxu0 %v622
        %624 = vmatprep.subr.mxu0 0.0
        %v625 = vand.u32 %v246, 4294901760
        %626 = vmatpush1.msra.mxu0 %v625
        %627 = vmatprep.subr.mxu0 0.0
        %v628 = vand.u32 %v245, 4294901760
        %629 = vmatpush1.msra.mxu0 %v628
        %630 = vmatprep.subr.mxu0 0.0
        %v631 = vand.u32 %v244, 4294901760
        %632 = vmatpush1.msra.mxu0 %v631
        %633 = vmatprep.subr.mxu0 0.0
        %v634 = vand.u32 %v243, 4294901760
        %635 = vmatpush1.msra.mxu0 %v634
        %636 = vmatprep.subr.mxu0 0.0
        %v637 = vand.u32 %v242, 4294901760
        %638 = vmatpush1.msra.mxu0 %v637
        %639 = vmatprep.subr.mxu0 0.0
        %v640 = vand.u32 %v241, 4294901760
        %641 = vmatpush1.msra.mxu0 %v640
        %642 = vmatprep.subr.mxu0 0.0
        %v643 = vand.u32 %v240, 4294901760
        %644 = vmatpush1.msra.mxu0 %v643
        %645 = vmatprep.subr.mxu0 0.0
        %v646 = vand.u32 %v239, 4294901760
        %647 = vmatpush1.msra.mxu0 %v646
        %648 = vmatprep.subr.mxu0 0.0
        %v649 = vand.u32 %v238, 4294901760
        %650 = vmatpush1.msra.mxu0 %v649
        %651 = vmatprep.subr.mxu0 0.0
        %v652 = vand.u32 %v237, 4294901760
        %653 = vmatpush1.msra.mxu0 %v652
        %654 = vmatprep.subr.mxu0 0.0
        %655 = vmatpush2.msra.mxu0 0.0
        %656 = vmatprep.subr.mxu0 0.0
        %657 = vmatpush2.msra.mxu0 0.0
        %658 = vmatprep.subr.mxu0 0.0
        %659 = vmatpush2.msra.mxu0 0.0
        %660 = vmatprep.subr.mxu0 0.0
        %661 = vmatpush2.msra.mxu0 0.0
        %662 = vmatprep.subr.mxu0 0.0
        %663 = vmatpush2.msra.mxu0 0.0
        %664 = vmatprep.subr.mxu0 0.0
        %665 = vmatpush2.msra.mxu0 0.0
        %666 = vmatprep.subr.mxu0 0.0
        %667 = vmatpush2.msra.mxu0 0.0
        %668 = vmatprep.subr.mxu0 0.0
        %669 = vmatpush2.msra.mxu0 0.0
        %670 = vmatprep.subr.mxu0 0.0
        %671 = vmatpush2.msra.mxu0 0.0
        %672 = vmatprep.subr.mxu0 0.0
        %673 = vmatpush2.msra.mxu0 0.0
        %674 = vmatprep.subr.mxu0 0.0
        %675 = vmatpush2.msra.mxu0 0.0
        %676 = vmatprep.subr.mxu0 0.0
        %677 = vmatpush2.msra.mxu0 0.0
        %678 = vmatprep.subr.mxu0 0.0
        %679 = vmatpush2.msra.mxu0 0.0
        %680 = vmatprep.subr.mxu0 0.0
        %681 = vmatpush2.msra.mxu0 0.0
        %682 = vmatprep.subr.mxu0 0.0
        %683 = vmatpush2.msra.mxu0 0.0
        %684 = vmatprep.subr.mxu0 0.0
        %685 = vmatpush2.msra.mxu0 0.0
        %686 = vmatprep.mubr.f32.mxu0 0.0
        %v687 = vand.u32 %v236, 4294901760
        %v688 = vsub.f32 %v236, %v687
        %v689 = vand.u32 %v688, 4294901760
        %690 = vmatmul.mubr.f32.gmra.mxu0 %v689
        %v691 = vpop.f32.mrf.mxu0
        %v692 = vadd.f32 %v603, %v691
        %v693 = vpop.f32.mrf.mxu0
        %694 = vdwg.mxu0
        %695 = vmatprep.subr.mxu0 0.0
        %v696 = vand.u32 %v252, 4294901760
        %v697 = vsub.f32 %v252, %v696
        %v698 = vand.u32 %v697, 4294901760
        %699 = vmatpush1.msra.mxu0 %v698
        %700 = vmatprep.subr.mxu0 0.0
        %v701 = vand.u32 %v251, 4294901760
        %v702 = vsub.f32 %v251, %v701
        %v703 = vand.u32 %v702, 4294901760
        %704 = vmatpush1.msra.mxu0 %v703
        %705 = vmatprep.subr.mxu0 0.0
        %v706 = vand.u32 %v250, 4294901760
        %v707 = vsub.f32 %v250, %v706
        %v708 = vand.u32 %v707, 4294901760
        %709 = vmatpush1.msra.mxu0 %v708
        %710 = vmatprep.subr.mxu0 0.0
        %v711 = vand.u32 %v249, 4294901760
        %v712 = vsub.f32 %v249, %v711
        %v713 = vand.u32 %v712, 4294901760
        %714 = vmatpush1.msra.mxu0 %v713
        %715 = vmatprep.subr.mxu0 0.0
        %v716 = vand.u32 %v248, 4294901760
        %v717 = vsub.f32 %v248, %v716
        %v718 = vand.u32 %v717, 4294901760
        %719 = vmatpush1.msra.mxu0 %v718
        %720 = vmatprep.subr.mxu0 0.0
        %v721 = vand.u32 %v247, 4294901760
        %v722 = vsub.f32 %v247, %v721
        %v723 = vand.u32 %v722, 4294901760
        %724 = vmatpush1.msra.mxu0 %v723
        %725 = vmatprep.subr.mxu0 0.0
        %v726 = vand.u32 %v246, 4294901760
        %v727 = vsub.f32 %v246, %v726
        %v728 = vand.u32 %v727, 4294901760
        %729 = vmatpush1.msra.mxu0 %v728
        %730 = vmatprep.subr.mxu0 0.0
        %v731 = vand.u32 %v245, 4294901760
        %v732 = vsub.f32 %v245, %v731
        %v733 = vand.u32 %v732, 4294901760
        %734 = vmatpush1.msra.mxu0 %v733
        %735 = vmatprep.subr.mxu0 0.0
        %v736 = vand.u32 %v244, 4294901760
        %v737 = vsub.f32 %v244, %v736
        %v738 = vand.u32 %v737, 4294901760
        %739 = vmatpush1.msra.mxu0 %v738
        %740 = vmatprep.subr.mxu0 0.0
        %v741 = vand.u32 %v243, 4294901760
        %v742 = vsub.f32 %v243, %v741
        %v743 = vand.u32 %v742, 4294901760
        %744 = vmatpush1.msra.mxu0 %v743
        %745 = vmatprep.subr.mxu0 0.0
        %v746 = vand.u32 %v242, 4294901760
        %v747 = vsub.f32 %v242, %v746
        %v748 = vand.u32 %v747, 4294901760
        %749 = vmatpush1.msra.mxu0 %v748
        %750 = vmatprep.subr.mxu0 0.0
        %v751 = vand.u32 %v241, 4294901760
        %v752 = vsub.f32 %v241, %v751
        %v753 = vand.u32 %v752, 4294901760
        %754 = vmatpush1.msra.mxu0 %v753
        %755 = vmatprep.subr.mxu0 0.0
        %v756 = vand.u32 %v240, 4294901760
        %v757 = vsub.f32 %v240, %v756
        %v758 = vand.u32 %v757, 4294901760
        %759 = vmatpush1.msra.mxu0 %v758
        %760 = vmatprep.subr.mxu0 0.0
        %v761 = vand.u32 %v239, 4294901760
        %v762 = vsub.f32 %v239, %v761
        %v763 = vand.u32 %v762, 4294901760
        %764 = vmatpush1.msra.mxu0 %v763
        %765 = vmatprep.subr.mxu0 0.0
        %v766 = vand.u32 %v238, 4294901760
        %v767 = vsub.f32 %v238, %v766
        %v768 = vand.u32 %v767, 4294901760
        %769 = vmatpush1.msra.mxu0 %v768
        %770 = vmatprep.subr.mxu0 0.0
        %v771 = vand.u32 %v237, 4294901760
        %v772 = vsub.f32 %v237, %v771
        %v773 = vand.u32 %v772, 4294901760
        %774 = vmatpush1.msra.mxu0 %v773
        %775 = vmatprep.subr.mxu0 0.0
        %776 = vmatpush2.msra.mxu0 0.0
        %777 = vmatprep.subr.mxu0 0.0
        %778 = vmatpush2.msra.mxu0 0.0
        %779 = vmatprep.subr.mxu0 0.0
        %780 = vmatpush2.msra.mxu0 0.0
        %781 = vmatprep.subr.mxu0 0.0
        %782 = vmatpush2.msra.mxu0 0.0
        %783 = vmatprep.subr.mxu0 0.0
        %784 = vmatpush2.msra.mxu0 0.0
        %785 = vmatprep.subr.mxu0 0.0
        %786 = vmatpush2.msra.mxu0 0.0
        %787 = vmatprep.subr.mxu0 0.0
        %788 = vmatpush2.msra.mxu0 0.0
        %789 = vmatprep.subr.mxu0 0.0
        %790 = vmatpush2.msra.mxu0 0.0
        %791 = vmatprep.subr.mxu0 0.0
        %792 = vmatpush2.msra.mxu0 0.0
        %793 = vmatprep.subr.mxu0 0.0
        %794 = vmatpush2.msra.mxu0 0.0
        %795 = vmatprep.subr.mxu0 0.0
        %796 = vmatpush2.msra.mxu0 0.0
        %797 = vmatprep.subr.mxu0 0.0
        %798 = vmatpush2.msra.mxu0 0.0
        %799 = vmatprep.subr.mxu0 0.0
        %800 = vmatpush2.msra.mxu0 0.0
        %801 = vmatprep.subr.mxu0 0.0
        %802 = vmatpush2.msra.mxu0 0.0
        %803 = vmatprep.subr.mxu0 0.0
        %804 = vmatpush2.msra.mxu0 0.0
        %805 = vmatprep.subr.mxu0 0.0
        %806 = vmatpush2.msra.mxu0 0.0
        %807 = vmatprep.mubr.f32.mxu0 0.0
        %v808 = vand.u32 %v236, 4294901760
        %809 = vmatmul.mubr.f32.gmra.mxu0 %v808
        %v810 = vpop.f32.mrf.mxu0
        %v811 = vadd.f32 %v692, %v810
        %v812 = vpop.f32.mrf.mxu0
        %813 = vdwg.mxu0
        %814 = vmatprep.subr.mxu0 0.0
        %v815 = vand.u32 %v252, 4294901760
        %816 = vmatpush1.msra.mxu0 %v815
        %817 = vmatprep.subr.mxu0 0.0
        %v818 = vand.u32 %v251, 4294901760
        %819 = vmatpush1.msra.mxu0 %v818
        %820 = vmatprep.subr.mxu0 0.0
        %v821 = vand.u32 %v250, 4294901760
        %822 = vmatpush1.msra.mxu0 %v821
        %823 = vmatprep.subr.mxu0 0.0
        %v824 = vand.u32 %v249, 4294901760
        %825 = vmatpush1.msra.mxu0 %v824
        %826 = vmatprep.subr.mxu0 0.0
        %v827 = vand.u32 %v248, 4294901760
        %828 = vmatpush1.msra.mxu0 %v827
        %829 = vmatprep.subr.mxu0 0.0
        %v830 = vand.u32 %v247, 4294901760
        %831 = vmatpush1.msra.mxu0 %v830
        %832 = vmatprep.subr.mxu0 0.0
        %v833 = vand.u32 %v246, 4294901760
        %834 = vmatpush1.msra.mxu0 %v833
        %835 = vmatprep.subr.mxu0 0.0
        %v836 = vand.u32 %v245, 4294901760
        %837 = vmatpush1.msra.mxu0 %v836
        %838 = vmatprep.subr.mxu0 0.0
        %v839 = vand.u32 %v244, 4294901760
        %840 = vmatpush1.msra.mxu0 %v839
        %841 = vmatprep.subr.mxu0 0.0
        %v842 = vand.u32 %v243, 4294901760
        %843 = vmatpush1.msra.mxu0 %v842
        %844 = vmatprep.subr.mxu0 0.0
        %v845 = vand.u32 %v242, 4294901760
        %846 = vmatpush1.msra.mxu0 %v845
        %847 = vmatprep.subr.mxu0 0.0
        %v848 = vand.u32 %v241, 4294901760
        %849 = vmatpush1.msra.mxu0 %v848
        %850 = vmatprep.subr.mxu0 0.0
        %v851 = vand.u32 %v240, 4294901760
        %852 = vmatpush1.msra.mxu0 %v851
        %853 = vmatprep.subr.mxu0 0.0
        %v854 = vand.u32 %v239, 4294901760
        %855 = vmatpush1.msra.mxu0 %v854
        %856 = vmatprep.subr.mxu0 0.0
        %v857 = vand.u32 %v238, 4294901760
        %858 = vmatpush1.msra.mxu0 %v857
        %859 = vmatprep.subr.mxu0 0.0
        %v860 = vand.u32 %v237, 4294901760
        %861 = vmatpush1.msra.mxu0 %v860
        %862 = vmatprep.subr.mxu0 0.0
        %863 = vmatpush2.msra.mxu0 0.0
        %864 = vmatprep.subr.mxu0 0.0
        %865 = vmatpush2.msra.mxu0 0.0
        %866 = vmatprep.subr.mxu0 0.0
        %867 = vmatpush2.msra.mxu0 0.0
        %868 = vmatprep.subr.mxu0 0.0
        %869 = vmatpush2.msra.mxu0 0.0
        %870 = vmatprep.subr.mxu0 0.0
        %871 = vmatpush2.msra.mxu0 0.0
        %872 = vmatprep.subr.mxu0 0.0
        %873 = vmatpush2.msra.mxu0 0.0
        %874 = vmatprep.subr.mxu0 0.0
        %875 = vmatpush2.msra.mxu0 0.0
        %876 = vmatprep.subr.mxu0 0.0
        %877 = vmatpush2.msra.mxu0 0.0
        %878 = vmatprep.subr.mxu0 0.0
        %879 = vmatpush2.msra.mxu0 0.0
        %880 = vmatprep.subr.mxu0 0.0
        %881 = vmatpush2.msra.mxu0 0.0
        %882 = vmatprep.subr.mxu0 0.0
        %883 = vmatpush2.msra.mxu0 0.0
        %884 = vmatprep.subr.mxu0 0.0
        %885 = vmatpush2.msra.mxu0 0.0
        %886 = vmatprep.subr.mxu0 0.0
        %887 = vmatpush2.msra.mxu0 0.0
        %888 = vmatprep.subr.mxu0 0.0
        %889 = vmatpush2.msra.mxu0 0.0
        %890 = vmatprep.subr.mxu0 0.0
        %891 = vmatpush2.msra.mxu0 0.0
        %892 = vmatprep.subr.mxu0 0.0
        %893 = vmatpush2.msra.mxu0 0.0
        %894 = vmatprep.mubr.f32.mxu0 0.0
        %v895 = vand.u32 %v236, 4294901760
        %896 = vmatmul.mubr.f32.gmra.mxu0 %v895
        %v897 = vpop.f32.mrf.mxu0
        %v898 = vadd.f32 %v811, %v897
        %v899 = vpop.f32.mrf.mxu0
        %900 = vdwg.mxu0
        %901 = vst [vmem:[%s232] sm:$0xff] %v898
        %s902 = sand.u32 %s121, 1
        %s903 = scalar_lea.sflag [#allocation4], %s902
        %s904 = sand.u32 %s121, 1
        %s905 = smul.addr %s904, 8
        %s906 = scalar_lea.vmem [#allocation7], %s905
        // Predicated region
        $region41: #{tpu_custom_call.1} parent=31 // pred_check
          %p907 = pneg %p131
        $region42: #{tpu_custom_call.1} parent=31 // pred_check_branch
          %909 = sbr.rel (%p907) target = $region44
        $region43: #{tpu_custom_call.1} parent=31 // pred_region
          %s911 = ssub.s32 128, 128
          %912 = vsyncadd %s903, %s911
          %s913 = sadd.s32 %s26, %s25
          %s914 = smul.addr %s913, 128
          %s915 = scalar_lea.hbm %s3, %s914
          %s917 = sshll.u32 %s906, 4
          %s918 = int_to_ptr.vmem [resolvable:$true] %s917
          %920 = dma.vmem_to_hbm [thread:$0]  %s918, 128, %s915, %s903
        $region44: #{tpu_custom_call.1} parent=31 // pred_fallthru
          _
      $region32: #{tpu_custom_call.1} parent=5 // pred_fallthru
        _
      %p921 = scmp.le.s32.totalorder 2, %s16
      // Predicated region
      $region45: #{tpu_custom_call.1} parent=5 // pred_check
        %p922 = pneg %p921
      $region46: #{tpu_custom_call.1} parent=5 // pred_check_branch
        %924 = sbr.rel (%p922) target = $region48
      $region47: #{tpu_custom_call.1} parent=5 // pred_region
        %s925 = ssub.s32 %s16, 2
        // Predicated region
        $region49: #{tpu_custom_call.1} parent=47 // pred_check
          %p926 = pneg %p137
        $region50: #{tpu_custom_call.1} parent=47 // pred_check_branch
          %928 = sbr.rel (%p926) target = $region52
        $region51: #{tpu_custom_call.1} parent=47 // pred_region
          %s929 = sand.u32 %s122, 1
          %s930 = scalar_lea.sflag [#allocation4], %s929
          %s931 = sand.u32 %s122, 1
          %s932 = smul.addr %s931, 8
          %s933 = scalar_lea.vmem [#allocation7], %s932
          %934 = dma.done %s930, 128
        $region52: #{tpu_custom_call.1} parent=47 // pred_fallthru
          _
      $region48: #{tpu_custom_call.1} parent=5 // pred_fallthru
        _
    $region6: #{tpu_custom_call.1} parent=1 // loop_footer
      %s20 = sadd.s32 1, %s16
    $region7: #{tpu_custom_call.1} parent=1 // loop_footer_branch
      %15 = sbr.rel target = $region3
    $region8: #{tpu_custom_call.1} parent=1 // loop_exit
      _
    %935 = vsyncpa [#allocation3], 1
    %s936 = scalar_lea.sflag [#allocation3], 1
    %937 = vsyncpa %s936, 1
    %938 = vsyncpa [#allocation6], 1
    %939 = vsyncpa [#allocation4], 1
    %s940 = scalar_lea.sflag [#allocation4], 1
    %941 = vsyncpa %s940, 1

</llo_original>
